<compile_context>
chip_gen: v5e
topology: v5e:2x2
jax: 0.10.0
libtpu: 0.0.40
codegen_flags: <defaults>
</compile_context>

<pallas_src>
import functools

import jax
import jax.numpy as jnp
from jax.experimental import pallas as pl
from jax.experimental.pallas import tpu as pltpu

BN_EPS = 1e-5


# ------------------------------ Pallas kernel --------------------------------

def dssm_kernel(x_ref, w1_ref, b1_ref, w2_ref, b2_ref, out_ref, *, d_user_out):
    """Fused two-tower forward for one batch tile (batch on the lane axis).

    x_ref  : (D_in_total, TILE_B)   concatenated [user_in ; item_in] slab (bf16 or f32)
    w1_ref : (H_total, D_in_total)  block-diagonal folded Linear+BN, layer 1 (bf16 or f32)
    b1_ref : (H_total, 1)           f32
    w2_ref : (O_total, H_total)     block-diagonal folded Linear+BN, layer 2 (bf16 or f32)
    b2_ref : (O_total, 1)           f32
    out_ref: (1, TILE_B)            f32 sigmoid similarity scores (lane-dense)
    """
    x = x_ref[...]

    # Layer 1: Linear (+folded BN) -> ReLU, both towers in one block-diagonal MXU pass.
    h1 = jnp.dot(w1_ref[...], x, preferred_element_type=jnp.float32) + b1_ref[...]
    h1 = jnp.maximum(h1, 0.0)
    # TODO(synk): Dropout is eval-mode identity; training-mode RNG dropout not implemented.

    # Layer 2: cast the activation back to the weight dtype (bf16 MXU operands), f32 acc.
    h2 = jnp.dot(w2_ref[...], h1.astype(w2_ref.dtype),
                 preferred_element_type=jnp.float32) + b2_ref[...]
    h2 = jnp.maximum(h2, 0.0)

    # Split tower outputs along sublanes (static, 8-aligned offsets).
    u = h2[:d_user_out, :]          # (Du_out, TILE_B) user embedding (pre-normalize)
    v = h2[d_user_out:, :]          # (Di_out, TILE_B) item embedding (pre-normalize)

    # sigmoid( <u/||u||, v/||v||> )  ==  sigmoid( <u,v> / (||u|| * ||v||) )
    suv = jnp.sum(u * v, axis=0, keepdims=True)       # (1, TILE_B)
    su = jnp.sum(u * u, axis=0, keepdims=True)
    sv = jnp.sum(v * v, axis=0, keepdims=True)
    # F.normalize's clamp_min(||.||, 1e-12)  <=>  clamp sum-of-squares at 1e-24.
    inv_norm = (jax.lax.rsqrt(jnp.maximum(su, 1e-24)) *
                jax.lax.rsqrt(jnp.maximum(sv, 1e-24)))
    y = suv * inv_norm
    # Exact sigmoid: exp + reciprocal run on the EUP (separate VLIW slot).
    out_ref[...] = pl.reciprocal(1.0 + jnp.exp(-y))


# ------------------------------ tiling / limits -------------------------------

def choose_tile_b(batch, max_tile_b=2048):
    """128-aligned batch tile.

    - batch <= 128: a single minimal 128-wide tile (minimizes wasted padded columns).
    - batch  > 128: at least two balanced tiles (feeds both v7x TensorCores via the
      "parallel" batch axis), capped at max_tile_b (sweep-chosen 1024-4096 band so the
      ~0.35us per-grid-step overhead is amortized).  cdiv-based b_pad guarantees padding
      never exceeds one tile's worth.
    """
    if batch <= 128:
        return 128
    half_aligned = pl.cdiv(pl.cdiv(batch, 2), 128) * 128
    return int(min(max_tile_b, half_aligned))


def vmem_limit_bytes(d_in, h_tot, o_tot, tile_b, in_itemsize):
    """Working-set estimate with ~4x headroom.  VMEM is NOT the binding constraint here:
    even tile_b=8192 in f32 is ~10 MiB, well under v5e's 16 MiB scoped default and v7x's
    64 MiB physical VMEM; this just scales the explicit limit sanely with tile_b."""
    act = 2 * d_in * tile_b * in_itemsize                       # double-buffered x tile
    temps = (h_tot + o_tot + 4) * tile_b * 4                    # f32 h1/h2/output temps
    weights = 2 * ((h_tot * d_in + o_tot * h_tot) * in_itemsize
                   + (h_tot + o_tot) * 4)
    est = act + temps + weights
    return int(min(max(4 * est, 16 * 1024 * 1024), 48 * 1024 * 1024))


# ------------------------------ kernel wrapper --------------------------------

def dssm_pallas_scores(x_slab, fused_params, batch, tile_b):
    """x_slab: (D_in_total, B_pad) activation slab (bf16/f32). Returns f32 (batch,)."""
    w1, b1, w2, b2, d_user_out = fused_params
    d_in, b_pad = x_slab.shape
    n_tiles = b_pad // tile_b
    h_tot = w1.shape[0]
    o_tot = w2.shape[0]

    kernel = functools.partial(dssm_kernel, d_user_out=d_user_out)
    # Constant index_map => fetched once, VMEM-resident across all grid steps.
    resident = lambda i: (0, 0)
    out = pl.pallas_call(
        kernel,
        out_shape=jax.ShapeDtypeStruct((1, b_pad), jnp.float32),
        grid_spec=pltpu.PrefetchScalarGridSpec(
            num_scalar_prefetch=0,
            grid=(n_tiles,),
            in_specs=[
                pl.BlockSpec((d_in, tile_b), lambda i: (0, i)),   # activations: pipelined
                pl.BlockSpec((h_tot, d_in), resident),
                pl.BlockSpec((h_tot, 1), resident),
                pl.BlockSpec((o_tot, h_tot), resident),
                pl.BlockSpec((o_tot, 1), resident),
            ],
            out_specs=pl.BlockSpec((1, tile_b), lambda i: (0, i)),  # lane-dense scores
        ),
        compiler_params=pltpu.CompilerParams(
            dimension_semantics=("parallel",),          # megacore-shard batch tiles (v7x)
            vmem_limit_bytes=vmem_limit_bytes(d_in, h_tot, o_tot, tile_b,
                                              x_slab.dtype.itemsize),
        ),
    )(x_slab, w1, b1, w2, b2)
    return out[0, :batch]


def dssm_forward(user_tables_t, item_tables_t, user_ids, item_ids, fused_params,
                 *, compute_dtype=jnp.bfloat16, max_tile_b=2048):
    """End-to-end DSSM (mode=None path): gather -> fused towers -> sigmoid(similarity).

    Embedding tables must be pre-transposed: (embed_dim, vocab)."""
    w1, b1, w2, b2, d_user_out = fused_params
    batch = int(user_ids[0].shape[0])
    tile_b = choose_tile_b(batch, max_tile_b)
    n_tiles = pl.cdiv(batch, tile_b)
    b_pad = int(n_tiles * tile_b)                 # never pads more than one tile's worth

    # Pad the (cheap) int32 id vectors, then gather the pre-transposed tables along
    # axis=1: the concatenated activation slab is produced directly in (D_in, B_pad)
    # layout in the compute dtype — no transpose or pad pass over the big slab.
    # TODO(synk): at production batch sizes this gather could be fused into the kernel
    # (PrefetchScalarGridSpec scalar-prefetched ids + VMEM-resident tables).
    def gather_t(tables_t, id_lists):
        cols = []
        for tbl_t, ids in zip(tables_t, id_lists):
            if b_pad != batch:
                ids = jnp.pad(ids, (0, b_pad - batch))
            cols.append(jnp.take(tbl_t, ids, axis=1).astype(compute_dtype))
        return cols

    x = jnp.concatenate(gather_t(user_tables_t, user_ids) +
                        gather_t(item_tables_t, item_ids), axis=0)

    cast_params = (w1.astype(compute_dtype), b1,          # biases stay f32
                   w2.astype(compute_dtype), b2, d_user_out)
    return dssm_pallas_scores(x, cast_params, batch, tile_b)


# ------------------------------ glue / setup ---------------------------------

def make_tower_layers(key, in_dim, dims):
    """Per-layer raw params, PyTorch layout: Linear (out,in)+(out,), BatchNorm1d stats."""
    layers = []
    for out_dim in dims:
        key, kw, kb, kg, kbe, km, kv = jax.random.split(key, 7)
        layers.append(dict(
            w=jax.random.normal(kw, (out_dim, in_dim), jnp.float32) * 0.1,
            b=jax.random.normal(kb, (out_dim,), jnp.float32) * 0.05,
            gamma=1.0 + 0.1 * jax.random.normal(kg, (out_dim,), jnp.float32),
            beta=0.1 * jax.random.normal(kbe, (out_dim,), jnp.float32),
            mean=0.05 * jax.random.normal(km, (out_dim,), jnp.float32),
            var=1.0 + 0.1 * jax.random.uniform(kv, (out_dim,), jnp.float32),
        ))
        in_dim = out_dim
    return layers, key


def fold_layer(layer):
    """Fold eval-mode BatchNorm1d into the preceding Linear: W' (out,in), b' (out,)."""
    s = layer["gamma"] / jnp.sqrt(layer["var"] + BN_EPS)
    w = layer["w"] * s[:, None]
    b = (layer["b"] - layer["mean"]) * s + layer["beta"]
    return w, b


def block_diag(a, b):
    out = jnp.zeros((a.shape[0] + b.shape[0], a.shape[1] + b.shape[1]), a.dtype)
    out = out.at[:a.shape[0], :a.shape[1]].set(a)
    out = out.at[a.shape[0]:, a.shape[1]:].set(b)
    return out


def fuse_towers(user_layers, item_layers):
    """Fold BN and fuse the two 2-layer towers into block-diagonal weights."""
    uw1, ub1 = fold_layer(user_layers[0])
    uw2, ub2 = fold_layer(user_layers[1])
    iw1, ib1 = fold_layer(item_layers[0])
    iw2, ib2 = fold_layer(item_layers[1])
    w1 = block_diag(uw1, iw1)                    # (Hu+Hi, Du+Di)
    b1 = jnp.concatenate([ub1, ib1])[:, None]    # (Hu+Hi, 1)
    w2 = block_diag(uw2, iw2)                    # (Ou+Oi, Hu+Hi)
    b2 = jnp.concatenate([ub2, ib2])[:, None]    # (Ou+Oi, 1)
    return (w1, b1, w2, b2, int(uw2.shape[0]))


def embedding_concat_rows(tables_t, id_lists):
    """Reference EmbeddingLayer(..., squeeze_dim=True): (B, sum(embed_dim)) in f32."""
    return jnp.concatenate(
        [jnp.take(t, ids, axis=1).T for t, ids in zip(tables_t, id_lists)], axis=1)


def reference_forward(user_in, item_in, user_layers, item_layers):
    """Pure-JAX reference mirroring the PyTorch forward (eval mode, raw params)."""
    def tower(x, layers):
        h = x
        for p in layers:
            h = h @ p["w"].T + p["b"]
            h = (h - p["mean"]) / jnp.sqrt(p["var"] + BN_EPS) * p["gamma"] + p["beta"]
            h = jnp.maximum(h, 0.0)
        n = jnp.sqrt(jnp.sum(h * h, axis=1, keepdims=True))
        return h / jnp.maximum(n, 1e-12)

    u = tower(user_in, user_layers)
    v = tower(item_in, item_layers)
    return jax.nn.sigmoid(jnp.sum(u * v, axis=1))


# ------------------------------ test harness ---------------------------------

if __name__ == "__main__":
    key = jax.random.PRNGKey(0)

    # Synthetic feature config:
    #   user features: user_id (vocab 100, d=16), user_age_bin (vocab 20, d=16) -> 32
    #   item features: item_id (vocab 200, d=16), item_cate    (vocab 30, d=16) -> 32
    embed_dim = 16
    user_vocabs = [100, 20]
    item_vocabs = [200, 30]
    user_dims = embed_dim * len(user_vocabs)   # 32
    item_dims = embed_dim * len(item_vocabs)   # 32
    mlp_dims = [64, 32]                        # user_params["dims"] == item_params["dims"]

    # Embedding tables stored PRE-TRANSPOSED as (embed_dim, vocab).
    def make_tables(vocabs, key):
        tables = []
        for v in vocabs:
            key, k = jax.random.split(key)
            tables.append(jax.random.normal(k, (embed_dim, v), jnp.float32) * 0.1)
        return tables, key

    user_tables_t, key = make_tables(user_vocabs, key)
    item_tables_t, key = make_tables(item_vocabs, key)

    # Raw tower params (Linear + BN stats), then host-side BN fold + block-diag fusion.
    user_layers, key = make_tower_layers(key, user_dims, mlp_dims)
    item_layers, key = make_tower_layers(key, item_dims, mlp_dims)
    fused_params = fuse_towers(user_layers, item_layers)

    def run_case(batch, compute_dtype, tol, key):
        key, k1, k2, k3, k4 = jax.random.split(key, 5)
        user_ids = [jax.random.randint(k1, (batch,), 0, user_vocabs[0]),
                    jax.random.randint(k2, (batch,), 0, user_vocabs[1])]
        item_ids = [jax.random.randint(k3, (batch,), 0, item_vocabs[0]),
                    jax.random.randint(k4, (batch,), 0, item_vocabs[1])]

        scores = jax.block_until_ready(
            dssm_forward(user_tables_t, item_tables_t, user_ids, item_ids,
                         fused_params, compute_dtype=compute_dtype))

        # Parity against a pure-JAX reference using the UNFOLDED params (also validates
        # BN folding + block-diagonal fusion + the transposed-gather glue).
        user_in = embedding_concat_rows(user_tables_t, user_ids)
        item_in = embedding_concat_rows(item_tables_t, item_ids)
        ref = reference_forward(user_in, item_in, user_layers, item_layers)

        assert scores.shape == (batch,)
        assert bool(jnp.all(jnp.isfinite(scores)))
        assert jnp.allclose(scores, ref, rtol=tol, atol=tol)
        return key

    # Small batch, f32 operands: tight parity, single-tile path.
    key = run_case(8, jnp.float32, 1e-4, key)
    # Larger batch, bf16 operands (the performance configuration): exercises id padding
    # and the >=2-balanced-tiles grid; tolerance relaxed for bf16 matmul operands.
    key = run_case(300, jnp.bfloat16, 2e-2, key)

    print("KERNEL_OK")
</pallas_src>

<mosaic_0001>
module attributes {stable_mosaic.version = 11 : i64} {
  func.func @dssm_kernel(%arg0: i32, %arg1: memref<64x128xf32, #tpu.memory_space<vmem>>, %arg2: memref<128x64xf32, #tpu.memory_space<vmem>>, %arg3: memref<128x1xf32, #tpu.memory_space<vmem>>, %arg4: memref<64x128xf32, #tpu.memory_space<vmem>>, %arg5: memref<64x1xf32, #tpu.memory_space<vmem>>, %arg6: memref<1x128xf32, #tpu.memory_space<vmem>>) attributes {dimension_semantics = [#tpu.dimension_semantics<parallel>], iteration_bounds = array<i64: 1>, scalar_prefetch = 0 : i64, scratch_operands = 0 : i64, tpu.core_type = #tpu.core_type<tc>, window_params = [{transform_indices = @transform_0, window_bounds = array<i64: 64, 128>}, {pipeline_mode = #tpu.pipeline_mode<synchronous>, transform_indices = @transform_1, window_bounds = array<i64: 128, 64>}, {pipeline_mode = #tpu.pipeline_mode<synchronous>, transform_indices = @transform_2, window_bounds = array<i64: 128, 1>}, {pipeline_mode = #tpu.pipeline_mode<synchronous>, transform_indices = @transform_3, window_bounds = array<i64: 64, 128>}, {pipeline_mode = #tpu.pipeline_mode<synchronous>, transform_indices = @transform_4, window_bounds = array<i64: 64, 1>}, {transform_indices = @transform_5, window_bounds = array<i64: 1, 128>}]} {
    %c0 = arith.constant 0 : index
    %c0_0 = arith.constant 0 : index
    %0 = vector.load %arg1[%c0, %c0_0] : memref<64x128xf32, #tpu.memory_space<vmem>>, vector<64x128xf32>
    %c0_1 = arith.constant 0 : index
    %c0_2 = arith.constant 0 : index
    %1 = vector.load %arg2[%c0_1, %c0_2] : memref<128x64xf32, #tpu.memory_space<vmem>>, vector<128x64xf32>
    %cst = arith.constant dense<0.000000e+00> : vector<128x128xf32>
    %2 = tpu.matmul %1, %0, %cst {dimension_numbers = #tpu.dot_dimension_numbers<[1], [0], [0], [1], [0, 0, 1, 1], [], []>} : vector<128x64xf32>, vector<64x128xf32>, vector<128x128xf32> -> vector<128x128xf32>
    %c0_3 = arith.constant 0 : index
    %c0_4 = arith.constant 0 : index
    %3 = vector.load %arg3[%c0_3, %c0_4] : memref<128x1xf32, #tpu.memory_space<vmem>>, vector<128x1xf32>
    %4 = vector.broadcast %3 : vector<128x1xf32> to vector<128x128xf32>
    %5 = arith.addf %2, %4 : vector<128x128xf32>
    %cst_5 = arith.constant 0.000000e+00 : f32
    %6 = vector.broadcast %cst_5 : f32 to vector<128x128xf32>
    %7 = arith.maximumf %5, %6 : vector<128x128xf32>
    %c0_6 = arith.constant 0 : index
    %c0_7 = arith.constant 0 : index
    %8 = vector.load %arg4[%c0_6, %c0_7] : memref<64x128xf32, #tpu.memory_space<vmem>>, vector<64x128xf32>
    %cst_8 = arith.constant dense<0.000000e+00> : vector<64x128xf32>
    %9 = tpu.matmul %8, %7, %cst_8 {dimension_numbers = #tpu.dot_dimension_numbers<[1], [0], [0], [1], [0, 0, 1, 1], [], []>} : vector<64x128xf32>, vector<128x128xf32>, vector<64x128xf32> -> vector<64x128xf32>
    %c0_9 = arith.constant 0 : index
    %c0_10 = arith.constant 0 : index
    %10 = vector.load %arg5[%c0_9, %c0_10] : memref<64x1xf32, #tpu.memory_space<vmem>>, vector<64x1xf32>
    %11 = vector.broadcast %10 : vector<64x1xf32> to vector<64x128xf32>
    %12 = arith.addf %9, %11 : vector<64x128xf32>
    %cst_11 = arith.constant 0.000000e+00 : f32
    %13 = vector.broadcast %cst_11 : f32 to vector<64x128xf32>
    %14 = arith.maximumf %12, %13 : vector<64x128xf32>
    %15 = vector.extract_strided_slice %14 {offsets = [0, 0], sizes = [32, 128], strides = [1, 1]} : vector<64x128xf32> to vector<32x128xf32>
    %16 = vector.extract_strided_slice %14 {offsets = [32, 0], sizes = [32, 128], strides = [1, 1]} : vector<64x128xf32> to vector<32x128xf32>
    %17 = arith.mulf %15, %16 : vector<32x128xf32>
    %cst_12 = arith.constant dense<0.000000e+00> : vector<128xf32>
    %18 = vector.multi_reduction <add>, %17, %cst_12 [0] : vector<32x128xf32> to vector<128xf32>
    %19 = vector.shape_cast %18 : vector<128xf32> to vector<1x128xf32>
    %20 = arith.mulf %15, %15 : vector<32x128xf32>
    %cst_13 = arith.constant dense<0.000000e+00> : vector<128xf32>
    %21 = vector.multi_reduction <add>, %20, %cst_13 [0] : vector<32x128xf32> to vector<128xf32>
    %22 = vector.shape_cast %21 : vector<128xf32> to vector<1x128xf32>
    %23 = arith.mulf %16, %16 : vector<32x128xf32>
    %cst_14 = arith.constant dense<0.000000e+00> : vector<128xf32>
    %24 = vector.multi_reduction <add>, %23, %cst_14 [0] : vector<32x128xf32> to vector<128xf32>
    %25 = vector.shape_cast %24 : vector<128xf32> to vector<1x128xf32>
    %cst_15 = arith.constant 1.000000e-24 : f32
    %26 = vector.broadcast %cst_15 : f32 to vector<1x128xf32>
    %27 = arith.maximumf %22, %26 : vector<1x128xf32>
    %28 = math.rsqrt %27 : vector<1x128xf32>
    %cst_16 = arith.constant 1.000000e-24 : f32
    %29 = vector.broadcast %cst_16 : f32 to vector<1x128xf32>
    %30 = arith.maximumf %25, %29 : vector<1x128xf32>
    %31 = math.rsqrt %30 : vector<1x128xf32>
    %32 = arith.mulf %28, %31 : vector<1x128xf32>
    %33 = arith.mulf %19, %32 : vector<1x128xf32>
    %cst_17 = arith.constant 0.000000e+00 : f32
    %34 = vector.broadcast %cst_17 : f32 to vector<1x128xf32>
    %35 = arith.subf %34, %33 : vector<1x128xf32>
    %36 = math.exp %35 : vector<1x128xf32>
    %cst_18 = arith.constant 1.000000e+00 : f32
    %37 = vector.broadcast %cst_18 : f32 to vector<1x128xf32>
    %38 = arith.addf %37, %36 : vector<1x128xf32>
    %39 = tpu.reciprocal %38 : vector<1x128xf32> -> vector<1x128xf32>
    %c0_19 = arith.constant 0 : index
    %c0_20 = arith.constant 0 : index
    %40 = vector.load %arg6[%c0_19, %c0_20] : memref<1x128xf32, #tpu.memory_space<vmem>>, vector<1x128xf32>
    tpu.vector_store %arg6[%c0_19, %c0_20], %39 {strides = array<i32>} : memref<1x128xf32, #tpu.memory_space<vmem>>, vector<1x128xf32>,
    return
  }
  func.func @transform_0(%arg0: i32) -> (i32, i32) {
    %c0_i32 = arith.constant 0 : i32
    %c0_i32_0 = arith.constant 0 : i32
    return %c0_i32, %arg0 : i32, i32
  }
  func.func @transform_1(%arg0: i32) -> (i32, i32) {
    %c0_i32 = arith.constant 0 : i32
    %c0_i32_0 = arith.constant 0 : i32
    %c0_i32_1 = arith.constant 0 : i32
    return %c0_i32, %c0_i32_0 : i32, i32
  }
  func.func @transform_2(%arg0: i32) -> (i32, i32) {
    %c0_i32 = arith.constant 0 : i32
    %c0_i32_0 = arith.constant 0 : i32
    %c0_i32_1 = arith.constant 0 : i32
    return %c0_i32, %c0_i32_0 : i32, i32
  }
  func.func @transform_3(%arg0: i32) -> (i32, i32) {
    %c0_i32 = arith.constant 0 : i32
    %c0_i32_0 = arith.constant 0 : i32
    %c0_i32_1 = arith.constant 0 : i32
    return %c0_i32, %c0_i32_0 : i32, i32
  }
  func.func @transform_4(%arg0: i32) -> (i32, i32) {
    %c0_i32 = arith.constant 0 : i32
    %c0_i32_0 = arith.constant 0 : i32
    %c0_i32_1 = arith.constant 0 : i32
    return %c0_i32, %c0_i32_0 : i32, i32
  }
  func.func @transform_5(%arg0: i32) -> (i32, i32) {
    %c0_i32 = arith.constant 0 : i32
    %c0_i32_0 = arith.constant 0 : i32
    return %c0_i32, %arg0 : i32, i32
  }
}

</mosaic_0001>

<llo_original>
// kernel: tpu_custom_call.1
$region0: #{tpu_custom_call.1}
  #allocation0 [shape = 'u32[]', space=smem, size = 0x4, offset = 0x4, fixed_abs, tag = 'smem constant byte address 0x4 - core index']
  #allocation1 [shape = 'u32[72,128]{1,0:T(1,128)}', space=vmem, size = 0x9000, scoped, tag = 'internal scratch']
  %s0 = inlined_call_operand.vmem [shape: f32[64,128], index: 0, kind: input, shape index: {}]
  %s1 = inlined_call_operand.vmem [shape: f32[128,64], index: 1, kind: input, shape index: {}]
  %s2 = inlined_call_operand.vmem [shape: f32[128,1], index: 2, kind: input, shape index: {}]
  %s3 = inlined_call_operand.vmem [shape: f32[64,128], index: 3, kind: input, shape index: {}]
  %s4 = inlined_call_operand.vmem [shape: f32[64,1], index: 4, kind: input, shape index: {}]
  %s5 = inlined_call_operand.hbm [shape: f32[1,128], index: 5, kind: output, shape index: {}]
  %s6 = sld [smem:[#allocation0]]
  $region30: #{tpu_custom_call.1} parent=0
    _
  %s8 = ssub.s32 1, %s6
  %s9 = scalar_select 0, %s8, %s6
  $region1: #{tpu_custom_call.1} parent=0
    #allocation2 [shape = 'u8[512]{0}', space=vmem, size = 0x400, scoped, tag = 'output window, operand 0, single buffered']
    #allocation3 [shape = 's32[1]{0}', space=sflag, size = 0x4, scoped, tag = 'scoped memory for tpu_custom_call.1']
    %10 = vsyncpa [#allocation3], 0
    // Predicated region
    $region2: #{tpu_custom_call.1} parent=1 // pred_check
      _
    $region3: #{tpu_custom_call.1} parent=1 // pred_check_branch
      %12 = sbr.rel (0) target = $region5
    $region4: #{tpu_custom_call.1} parent=1 // pred_region
      _
    $region5: #{tpu_custom_call.1} parent=1 // pred_fallthru
      _
    // Predicated region
    $region6: #{tpu_custom_call.1} parent=1 // pred_check
      _
    $region7: #{tpu_custom_call.1} parent=1 // pred_check_branch
      %14 = sbr.rel (0) target = $region9
    $region8: #{tpu_custom_call.1} parent=1 // pred_region
      _
    $region9: #{tpu_custom_call.1} parent=1 // pred_fallthru
      _
    // Predicated region
    $region10: #{tpu_custom_call.1} parent=1 // pred_check
      _
    $region11: #{tpu_custom_call.1} parent=1 // pred_check_branch
      %16 = sbr.rel (0) target = $region13
    $region12: #{tpu_custom_call.1} parent=1 // pred_region
      _
    $region13: #{tpu_custom_call.1} parent=1 // pred_fallthru
      _
    // Predicated region
    $region14: #{tpu_custom_call.1} parent=1 // pred_check
      _
    $region15: #{tpu_custom_call.1} parent=1 // pred_check_branch
      %18 = sbr.rel (0) target = $region17
    $region16: #{tpu_custom_call.1} parent=1 // pred_region
      _
    $region17: #{tpu_custom_call.1} parent=1 // pred_fallthru
      _
    // Predicated region
    $region18: #{tpu_custom_call.1} parent=1 // pred_check
      _
    $region19: #{tpu_custom_call.1} parent=1 // pred_check_branch
      %20 = sbr.rel (0) target = $region21
    $region20: #{tpu_custom_call.1} parent=1 // pred_region
      _
    $region21: #{tpu_custom_call.1} parent=1 // pred_fallthru
      _
    %v21 = vld [vmem:[%s0] sm:$0xff]
    %v22 = vld [vmem:[%s0 + $0x8] sm:$0xff]
    %v23 = vld [vmem:[%s0 + $0x10] sm:$0xff]
    %v24 = vld [vmem:[%s0 + $0x18] sm:$0xff]
    %v25 = vld [vmem:[%s0 + $0x20] sm:$0xff]
    %v26 = vld [vmem:[%s0 + $0x28] sm:$0xff]
    %v27 = vld [vmem:[%s0 + $0x30] sm:$0xff]
    %v28 = vld [vmem:[%s0 + $0x38] sm:$0xff]
    %v29 = vld [vmem:[%s1] sm:$0xff]
    %v30 = vld [vmem:[%s1 + $0x8] sm:$0xff]
    %v31 = vld [vmem:[%s1 + $0x10] sm:$0xff]
    %v32 = vld [vmem:[%s1 + $0x18] sm:$0xff]
    %v33 = vld [vmem:[%s1 + $0x20] sm:$0xff]
    %v34 = vld [vmem:[%s1 + $0x28] sm:$0xff]
    %v35 = vld [vmem:[%s1 + $0x30] sm:$0xff]
    %v36 = vld [vmem:[%s1 + $0x38] sm:$0xff]
    %v37 = vld [vmem:[%s1 + $0x40] sm:$0xff]
    %v38 = vld [vmem:[%s1 + $0x48] sm:$0xff]
    %v39 = vld [vmem:[%s1 + $0x50] sm:$0xff]
    %v40 = vld [vmem:[%s1 + $0x58] sm:$0xff]
    %v41 = vld [vmem:[%s1 + $0x60] sm:$0xff]
    %v42 = vld [vmem:[%s1 + $0x68] sm:$0xff]
    %v43 = vld [vmem:[%s1 + $0x70] sm:$0xff]
    %v44 = vld [vmem:[%s1 + $0x78] sm:$0xff]
    %v45 = vld [vmem:[%s2] sm:$0xff]
    %v46 = vld [vmem:[%s2 + $0x8] sm:$0xff]
    %v47 = vld [vmem:[%s2 + $0x10] sm:$0xff]
    %v48 = vld [vmem:[%s2 + $0x18] sm:$0xff]
    %v49 = vld [vmem:[%s2 + $0x20] sm:$0xff]
    %v50 = vld [vmem:[%s2 + $0x28] sm:$0xff]
    %v51 = vld [vmem:[%s2 + $0x30] sm:$0xff]
    %v52 = vld [vmem:[%s2 + $0x38] sm:$0xff]
    %v53 = vld [vmem:[%s2 + $0x40] sm:$0xff]
    %v54 = vld [vmem:[%s2 + $0x48] sm:$0xff]
    %v55 = vld [vmem:[%s2 + $0x50] sm:$0xff]
    %v56 = vld [vmem:[%s2 + $0x58] sm:$0xff]
    %v57 = vld [vmem:[%s2 + $0x60] sm:$0xff]
    %v58 = vld [vmem:[%s2 + $0x68] sm:$0xff]
    %v59 = vld [vmem:[%s2 + $0x70] sm:$0xff]
    %v60 = vld [vmem:[%s2 + $0x78] sm:$0xff]
    %62 = vset.pattern.permute.xlu0 0
    %63 = vperm.xlu0 %62, %v45
    %v64 = vpop.permute.xlu0 %63
    %67 = vset.pattern.permute.xlu0 0
    %68 = vperm.xlu0 %67, %v46
    %v69 = vpop.permute.xlu0 %68
    %72 = vset.pattern.permute.xlu0 0
    %73 = vperm.xlu0 %72, %v47
    %v74 = vpop.permute.xlu0 %73
    %77 = vset.pattern.permute.xlu0 0
    %78 = vperm.xlu0 %77, %v48
    %v79 = vpop.permute.xlu0 %78
    %82 = vset.pattern.permute.xlu0 0
    %83 = vperm.xlu0 %82, %v49
    %v84 = vpop.permute.xlu0 %83
    %87 = vset.pattern.permute.xlu0 0
    %88 = vperm.xlu0 %87, %v50
    %v89 = vpop.permute.xlu0 %88
    %92 = vset.pattern.permute.xlu0 0
    %93 = vperm.xlu0 %92, %v51
    %v94 = vpop.permute.xlu0 %93
    %97 = vset.pattern.permute.xlu0 0
    %98 = vperm.xlu0 %97, %v52
    %v99 = vpop.permute.xlu0 %98
    %102 = vset.pattern.permute.xlu0 0
    %103 = vperm.xlu0 %102, %v53
    %v104 = vpop.permute.xlu0 %103
    %107 = vset.pattern.permute.xlu0 0
    %108 = vperm.xlu0 %107, %v54
    %v109 = vpop.permute.xlu0 %108
    %112 = vset.pattern.permute.xlu0 0
    %113 = vperm.xlu0 %112, %v55
    %v114 = vpop.permute.xlu0 %113
    %117 = vset.pattern.permute.xlu0 0
    %118 = vperm.xlu0 %117, %v56
    %v119 = vpop.permute.xlu0 %118
    %122 = vset.pattern.permute.xlu0 0
    %123 = vperm.xlu0 %122, %v57
    %v124 = vpop.permute.xlu0 %123
    %127 = vset.pattern.permute.xlu0 0
    %128 = vperm.xlu0 %127, %v58
    %v129 = vpop.permute.xlu0 %128
    %132 = vset.pattern.permute.xlu0 0
    %133 = vperm.xlu0 %132, %v59
    %v134 = vpop.permute.xlu0 %133
    %137 = vset.pattern.permute.xlu0 0
    %138 = vperm.xlu0 %137, %v60
    %v139 = vpop.permute.xlu0 %138
    %vm141 = vcmask 523264
    %v143 = vsel %vm141, %v29, 0
    %v146 = vsel %vm141, %v30, 0
    %v149 = vsel %vm141, %v31, 0
    %v152 = vsel %vm141, %v32, 0
    %v155 = vsel %vm141, %v33, 0
    %v158 = vsel %vm141, %v34, 0
    %v161 = vsel %vm141, %v35, 0
    %v164 = vsel %vm141, %v36, 0
    %v167 = vsel %vm141, %v37, 0
    %v170 = vsel %vm141, %v38, 0
    %v173 = vsel %vm141, %v39, 0
    %v176 = vsel %vm141, %v40, 0
    %v179 = vsel %vm141, %v41, 0
    %v182 = vsel %vm141, %v42, 0
    %v185 = vsel %vm141, %v43, 0
    %v188 = vsel %vm141, %v44, 0
    %190 = vmatpush.msra.mxu0 0.0
    %191 = vmatpush.msra.mxu0 0.0
    %192 = vmatpush.msra.mxu0 0.0
    %193 = vmatpush.msra.mxu0 0.0
    %194 = vmatpush.msra.mxu0 0.0
    %195 = vmatpush.msra.mxu0 0.0
    %196 = vmatpush.msra.mxu0 0.0
    %197 = vmatpush.msra.mxu0 0.0
    %198 = vmatpush.msra.mxu0 %v28
    %199 = vmatpush.msra.mxu0 %v27
    %200 = vmatpush.msra.mxu0 %v26
    %201 = vmatpush.msra.mxu0 %v25
    %202 = vmatpush.msra.mxu0 %v24
    %203 = vmatpush.msra.mxu0 %v23
    %204 = vmatpush.msra.mxu0 %v22
    %205 = vmatpush.msra.mxu0 %v21
    %206 = vmatmul.f32.gmra.mxu0 %v143
    %v207 = vpop.f32.mrf.mxu0
    %v208 = vadd.f32 %v64, %v207
    %209 = vmatmul.f32.gmra.mxu0 %v146
    %v210 = vpop.f32.mrf.mxu0
    %v211 = vadd.f32 %v69, %v210
    %212 = vmatmul.f32.gmra.mxu0 %v149
    %v213 = vpop.f32.mrf.mxu0
    %v214 = vadd.f32 %v74, %v213
    %215 = vmatmul.f32.gmra.mxu0 %v152
    %v216 = vpop.f32.mrf.mxu0
    %v217 = vadd.f32 %v79, %v216
    %218 = vmatmul.f32.gmra.mxu0 %v155
    %v219 = vpop.f32.mrf.mxu0
    %v220 = vadd.f32 %v84, %v219
    %221 = vmatmul.f32.gmra.mxu0 %v158
    %v222 = vpop.f32.mrf.mxu0
    %v223 = vadd.f32 %v89, %v222
    %224 = vmatmul.f32.gmra.mxu0 %v161
    %v225 = vpop.f32.mrf.mxu0
    %v226 = vadd.f32 %v94, %v225
    %227 = vmatmul.f32.gmra.mxu0 %v164
    %v228 = vpop.f32.mrf.mxu0
    %v229 = vadd.f32 %v99, %v228
    %230 = vmatmul.f32.gmra.mxu0 %v167
    %v231 = vpop.f32.mrf.mxu0
    %v232 = vadd.f32 %v104, %v231
    %233 = vmatmul.f32.gmra.mxu0 %v170
    %v234 = vpop.f32.mrf.mxu0
    %v235 = vadd.f32 %v109, %v234
    %236 = vmatmul.f32.gmra.mxu0 %v173
    %v237 = vpop.f32.mrf.mxu0
    %v238 = vadd.f32 %v114, %v237
    %239 = vmatmul.f32.gmra.mxu0 %v176
    %v240 = vpop.f32.mrf.mxu0
    %v241 = vadd.f32 %v119, %v240
    %242 = vmatmul.f32.gmra.mxu0 %v179
    %v243 = vpop.f32.mrf.mxu0
    %v244 = vadd.f32 %v124, %v243
    %245 = vmatmul.f32.gmra.mxu0 %v182
    %v246 = vpop.f32.mrf.mxu0
    %v247 = vadd.f32 %v129, %v246
    %248 = vmatmul.f32.gmra.mxu0 %v185
    %v249 = vpop.f32.mrf.mxu0
    %v250 = vadd.f32 %v134, %v249
    %251 = vmatmul.f32.gmra.mxu0 %v188
    %v252 = vpop.f32.mrf.mxu0
    %v253 = vadd.f32 %v139, %v252
    %254 = vdwg.mxu0
    %v255 = vmax.f32 %v208, 0.0
    %v256 = vmax.f32 %v211, 0.0
    %v257 = vmax.f32 %v214, 0.0
    %v258 = vmax.f32 %v217, 0.0
    %v259 = vmax.f32 %v220, 0.0
    %v260 = vmax.f32 %v223, 0.0
    %v261 = vmax.f32 %v226, 0.0
    %v262 = vmax.f32 %v229, 0.0
    %v263 = vmax.f32 %v232, 0.0
    %v264 = vmax.f32 %v235, 0.0
    %v265 = vmax.f32 %v238, 0.0
    %v266 = vmax.f32 %v241, 0.0
    %v267 = vmax.f32 %v244, 0.0
    %v268 = vmax.f32 %v247, 0.0
    %v269 = vmax.f32 %v250, 0.0
    %v270 = vmax.f32 %v253, 0.0
    %v271 = vld [vmem:[%s3] sm:$0xff]
    %v272 = vld [vmem:[%s3 + $0x8] sm:$0xff]
    %v273 = vld [vmem:[%s3 + $0x10] sm:$0xff]
    %v274 = vld [vmem:[%s3 + $0x18] sm:$0xff]
    %v275 = vld [vmem:[%s3 + $0x20] sm:$0xff]
    %v276 = vld [vmem:[%s3 + $0x28] sm:$0xff]
    %v277 = vld [vmem:[%s3 + $0x30] sm:$0xff]
    %v278 = vld [vmem:[%s3 + $0x38] sm:$0xff]
    %v279 = vld [vmem:[%s4] sm:$0xff]
    %v280 = vld [vmem:[%s4 + $0x8] sm:$0xff]
    %v281 = vld [vmem:[%s4 + $0x10] sm:$0xff]
    %v282 = vld [vmem:[%s4 + $0x18] sm:$0xff]
    %v283 = vld [vmem:[%s4 + $0x20] sm:$0xff]
    %v284 = vld [vmem:[%s4 + $0x28] sm:$0xff]
    %v285 = vld [vmem:[%s4 + $0x30] sm:$0xff]
    %v286 = vld [vmem:[%s4 + $0x38] sm:$0xff]
    %288 = vset.pattern.permute.xlu0 0
    %289 = vperm.xlu0 %288, %v279
    %v290 = vpop.permute.xlu0 %289
    %293 = vset.pattern.permute.xlu0 0
    %294 = vperm.xlu0 %293, %v280
    %v295 = vpop.permute.xlu0 %294
    %298 = vset.pattern.permute.xlu0 0
    %299 = vperm.xlu0 %298, %v281
    %v300 = vpop.permute.xlu0 %299
    %303 = vset.pattern.permute.xlu0 0
    %304 = vperm.xlu0 %303, %v282
    %v305 = vpop.permute.xlu0 %304
    %308 = vset.pattern.permute.xlu0 0
    %309 = vperm.xlu0 %308, %v283
    %v310 = vpop.permute.xlu0 %309
    %313 = vset.pattern.permute.xlu0 0
    %314 = vperm.xlu0 %313, %v284
    %v315 = vpop.permute.xlu0 %314
    %318 = vset.pattern.permute.xlu0 0
    %319 = vperm.xlu0 %318, %v285
    %v320 = vpop.permute.xlu0 %319
    %323 = vset.pattern.permute.xlu0 0
    %324 = vperm.xlu0 %323, %v286
    %v325 = vpop.permute.xlu0 %324
    %327 = vmatpush.msra.mxu0 %v270
    %328 = vmatpush.msra.mxu0 %v269
    %329 = vmatpush.msra.mxu0 %v268
    %330 = vmatpush.msra.mxu0 %v267
    %331 = vmatpush.msra.mxu0 %v266
    %332 = vmatpush.msra.mxu0 %v265
    %333 = vmatpush.msra.mxu0 %v264
    %334 = vmatpush.msra.mxu0 %v263
    %335 = vmatpush.msra.mxu0 %v262
    %336 = vmatpush.msra.mxu0 %v261
    %337 = vmatpush.msra.mxu0 %v260
    %338 = vmatpush.msra.mxu0 %v259
    %339 = vmatpush.msra.mxu0 %v258
    %340 = vmatpush.msra.mxu0 %v257
    %341 = vmatpush.msra.mxu0 %v256
    %342 = vmatpush.msra.mxu0 %v255
    %343 = vmatmul.f32.gmra.mxu0 %v271
    %v344 = vpop.f32.mrf.mxu0
    %v345 = vadd.f32 %v290, %v344
    %346 = vmatmul.f32.gmra.mxu0 %v272
    %v347 = vpop.f32.mrf.mxu0
    %v348 = vadd.f32 %v295, %v347
    %349 = vmatmul.f32.gmra.mxu0 %v273
    %v350 = vpop.f32.mrf.mxu0
    %v351 = vadd.f32 %v300, %v350
    %352 = vmatmul.f32.gmra.mxu0 %v274
    %v353 = vpop.f32.mrf.mxu0
    %v354 = vadd.f32 %v305, %v353
    %355 = vmatmul.f32.gmra.mxu0 %v275
    %v356 = vpop.f32.mrf.mxu0
    %v357 = vadd.f32 %v310, %v356
    %358 = vmatmul.f32.gmra.mxu0 %v276
    %v359 = vpop.f32.mrf.mxu0
    %v360 = vadd.f32 %v315, %v359
    %361 = vmatmul.f32.gmra.mxu0 %v277
    %v362 = vpop.f32.mrf.mxu0
    %v363 = vadd.f32 %v320, %v362
    %364 = vmatmul.f32.gmra.mxu0 %v278
    %v365 = vpop.f32.mrf.mxu0
    %v366 = vadd.f32 %v325, %v365
    %367 = vdwg.mxu0
    %v368 = vmax.f32 %v345, 0.0
    %v369 = vmax.f32 %v348, 0.0
    %v370 = vmax.f32 %v351, 0.0
    %v371 = vmax.f32 %v354, 0.0
    %v372 = vmax.f32 %v357, 0.0
    %v373 = vmax.f32 %v360, 0.0
    %v374 = vmax.f32 %v363, 0.0
    %v375 = vmax.f32 %v366, 0.0
    %v376 = vmul.f32 %v368, %v372
    %v377 = vmul.f32 %v369, %v373
    %v378 = vmul.f32 %v370, %v374
    %v379 = vmul.f32 %v371, %v375
    %v380 = vadd.f32 %v376, %v377
    %v381 = vadd.f32 %v380, %v378
    %v382 = vadd.f32 %v381, %v379
    %v383 = vrot.slane %v382, 4
    %v384 = vadd.f32 %v382, %v383
    %v385 = vrot.slane %v384, 2
    %v386 = vadd.f32 %v384, %v385
    %v387 = vrot.slane %v386, 1
    %v388 = vadd.f32 %v386, %v387
    %v389 = vmul.f32 %v368, %v368
    %v390 = vmul.f32 %v369, %v369
    %v391 = vmul.f32 %v370, %v370
    %v392 = vmul.f32 %v371, %v371
    %v393 = vadd.f32 %v389, %v390
    %v394 = vadd.f32 %v393, %v391
    %v395 = vadd.f32 %v394, %v392
    %v396 = vrot.slane %v395, 4
    %v397 = vadd.f32 %v395, %v396
    %v398 = vrot.slane %v397, 2
    %v399 = vadd.f32 %v397, %v398
    %v400 = vrot.slane %v399, 1
    %v401 = vadd.f32 %v399, %v400
    %v402 = vmul.f32 %v372, %v372
    %v403 = vmul.f32 %v373, %v373
    %v404 = vmul.f32 %v374, %v374
    %v405 = vmul.f32 %v375, %v375
    %v406 = vadd.f32 %v402, %v403
    %v407 = vadd.f32 %v406, %v404
    %v408 = vadd.f32 %v407, %v405
    %v409 = vrot.slane %v408, 4
    %v410 = vadd.f32 %v408, %v409
    %v411 = vrot.slane %v410, 2
    %v412 = vadd.f32 %v410, %v411
    %v413 = vrot.slane %v412, 1
    %v414 = vadd.f32 %v412, %v413
    %v415 = vmax.f32 %v401, 1e-24
    %v416 = vrsqrt.pop %v415
    %v417 = vmul.f32 %v416, %v415
    %v418 = vmul.f32 %v417, %v416
    %v419 = vmul.f32 0.5, %v418
    %v420 = vsub.f32 1.5, %v419
    %v421 = vmul.f32 %v416, %v420
    %vm422 = vweird.f32 %v415
    %vm423 = vweird.f32 %v416
    %vm424 = vmor %vm422, %vm423
    %v425 = vsel %vm424, %v416, %v421
    %v426 = vmax.f32 %v414, 1e-24
    %v427 = vrsqrt.pop %v426
    %v428 = vmul.f32 %v427, %v426
    %v429 = vmul.f32 %v428, %v427
    %v430 = vmul.f32 0.5, %v429
    %v431 = vsub.f32 1.5, %v430
    %v432 = vmul.f32 %v427, %v431
    %vm433 = vweird.f32 %v426
    %vm434 = vweird.f32 %v427
    %vm435 = vmor %vm433, %vm434
    %v436 = vsel %vm435, %v427, %v432
    %v437 = vmul.f32 %v425, %v436
    %v438 = vmul.f32 %v388, %v437
    %v439 = vsub.f32 0.0, %v438
    %v440 = vmul.f32 %v439, 1.442695
    %v441 = vpow.pop %v440
    %v442 = vadd.f32 %v441, 1.0
    %v443 = vrcp.pop %v442
    %v444 = vmul.f32 %v442, %v443
    %v445 = vsub.f32 1.0, %v444
    %v446 = vmul.f32 %v443, %v445
    %v447 = vadd.f32 %v443, %v446
    %vm448 = vweird.f32 %v442
    %vm449 = vweird.f32 %v443
    %vm450 = vmor %vm448, %vm449
    %v451 = vsel %vm450, %v443, %v447
    %v452 = vand.u32 2147483647, %v442
    %vm453 = vcmp.eq.f32.partialorder %v452, 8.507059e+37
    %v454 = vand.u32 %v442, 2147483648
    %v455 = vor.u32 1.1754944e-38, %v454
    %v456 = vsel %vm453, %v455, %v451
    %457 = vst [vmem:[#allocation2] sm:$0x1] %v456
    // Predicated region
    $region22: #{tpu_custom_call.1} parent=1 // pred_check
      _
    $region23: #{tpu_custom_call.1} parent=1 // pred_check_branch
      %459 = sbr.rel (0) target = $region25
    $region24: #{tpu_custom_call.1} parent=1 // pred_region
      %461 = vsyncadd [#allocation3], 0
      %s463 = sshll.u32 [#allocation2], 4
      %s464 = int_to_ptr.vmem [resolvable:$true] %s463
      %s465 = sshll.u32 %s5, 4
      %s466 = int_to_ptr.hbm [resolvable:$true] %s465
      %468 = dma.vmem_to_hbm [thread:$0]  %s464, 16, %s466, [#allocation3]
    $region25: #{tpu_custom_call.1} parent=1 // pred_fallthru
      _
    // Predicated region
    $region26: #{tpu_custom_call.1} parent=1 // pred_check
      _
    $region27: #{tpu_custom_call.1} parent=1 // pred_check_branch
      %470 = sbr.rel (0) target = $region29
    $region28: #{tpu_custom_call.1} parent=1 // pred_region
      %472 = dma.done [#allocation3], 16
    $region29: #{tpu_custom_call.1} parent=1 // pred_fallthru
      _
    %473 = vsyncpa [#allocation3], 1

</llo_original>
